<compile_context>
chip_gen: v5e
topology: v5e:2x2
jax: 0.10.0
libtpu: 0.0.40
codegen_flags: <defaults>
</compile_context>

<pallas_src>
import functools

import jax
import jax.numpy as jnp
from jax.experimental import pallas as pl
from jax.experimental.pallas import tpu as pltpu


# ---------------------------------------------------------------------------
# Shared gate math: fc2(relu(fc1(p))) as broadcast-multiply + reductions.
# w1t = fc1.weight.T  (C, hidden);  w2 = fc2.weight  (C, hidden).
# ---------------------------------------------------------------------------
def _gate(w1t_ref, w2_ref, avg_p, max_p, pool_mode):
    w1t = w1t_ref[...].astype(jnp.float32)            # (C, hidden)
    w2 = w2_ref[...].astype(jnp.float32)              # (C, hidden)

    def mlp(pooled):                                   # pooled: (C, 1) f32
        # h[j] = relu(sum_c W1[j,c] * pooled[c])  -> (1, hidden)  (sublane reduce)
        h = jnp.maximum(jnp.sum(w1t * pooled, axis=0, keepdims=True), 0.0)
        # o[c] = sum_j W2[c,j] * h[j]             -> (C, 1)       (lane reduce)
        return jnp.sum(w2 * h, axis=1, keepdims=True)

    logits = None
    if "Avg" in pool_mode:
        logits = mlp(avg_p)
    if "Max" in pool_mode:
        m = mlp(max_p)
        logits = m if logits is None else logits + m
    return 1.0 / (1.0 + jnp.exp(-logits))              # sigmoid, (C, 1) f32


# ---------------------------------------------------------------------------
# Fused single-pass kernel: grid (B,), block (1, C, N). 1 read + 1 write of x.
# ---------------------------------------------------------------------------
def _fused_kernel(x_ref, w1t_ref, w2_ref, o_ref, *, n_total, pool_mode):
    x = x_ref[0]                                       # (C, N), native dtype
    avg_p = None
    max_p = None
    if "Avg" in pool_mode:
        avg_p = (jnp.sum(x.astype(jnp.float32), axis=-1, keepdims=True)
                 * jnp.float32(1.0 / n_total))
    if "Max" in pool_mode:
        # Max in native dtype; cast the (C,1) result once.
        max_p = jnp.max(x, axis=-1, keepdims=True).astype(jnp.float32)
    scale = _gate(w1t_ref, w2_ref, avg_p, max_p, pool_mode)      # (C, 1) f32
    o_ref[0] = (x * scale.astype(x.dtype)).astype(o_ref.dtype)


# ---------------------------------------------------------------------------
# Phase-fused fallback kernel: grid (B, 2, n_tiles).
#   phase 0: accumulate pooled stats over lane-dense (C, tn) tiles, finalize gate.
#   phase 1: re-read tiles and apply the gate.
# ---------------------------------------------------------------------------
def _phase_kernel(x_ref, w1t_ref, w2_ref, o_ref, sum_acc, max_acc, scale_acc, *,
                  n_total, tile_n, pool_mode):
    phase = pl.program_id(1)
    n = pl.program_id(2)
    n_last = pl.num_programs(2) - 1
    ragged = (n_total % tile_n) != 0                   # static Python bool

    @pl.when(phase == 0)
    def _pool_phase():
        @pl.when(n == 0)
        def _init():
            if "Avg" in pool_mode:
                sum_acc[...] = jnp.zeros_like(sum_acc)
            if "Max" in pool_mode:
                max_acc[...] = jnp.full_like(max_acc, -jnp.inf)

        x = x_ref[0]                                   # (C, tile_n), native dtype

        def _accumulate(mask):
            if "Avg" in pool_mode:
                xf = x.astype(jnp.float32)
                if mask is not None:
                    xf = jnp.where(mask, xf, 0.0)
                sum_acc[...] += jnp.sum(xf, axis=-1, keepdims=True)
            if "Max" in pool_mode:
                xm = x
                if mask is not None:
                    xm = jnp.where(mask, xm, -jnp.inf)
                max_acc[...] = jnp.maximum(
                    max_acc[...],
                    jnp.max(xm, axis=-1, keepdims=True).astype(jnp.float32))

        if ragged:
            # Only the final tile pays the iota/compare/select masking cost.
            @pl.when(n != n_last)
            def _full_tile():
                _accumulate(None)

            @pl.when(n == n_last)
            def _ragged_tile():
                lane = jax.lax.broadcasted_iota(jnp.int32, x.shape, 1)
                _accumulate((n * tile_n + lane) < n_total)
        else:
            _accumulate(None)

        @pl.when(n == n_last)
        def _finalize():
            avg_p = (sum_acc[...] * jnp.float32(1.0 / n_total)
                     if "Avg" in pool_mode else None)
            max_p = max_acc[...] if "Max" in pool_mode else None
            scale_acc[...] = _gate(w1t_ref, w2_ref, avg_p, max_p, pool_mode)

    @pl.when(phase == 1)
    def _apply_phase():
        s = scale_acc[...].astype(x_ref.dtype)         # (C, 1)
        o_ref[0] = (x_ref[0] * s).astype(o_ref.dtype)


# ---------------------------------------------------------------------------
# Generation-aware VMEM budgeting / tile selection.
# ---------------------------------------------------------------------------
def _vmem_budget_bytes():
    """~75% of physical VMEM, capped at 48 MiB (v7x has only 64 MiB per TC)."""
    cap = 64 << 20                                     # smallest physical VMEM (v7x)
    try:
        info = pltpu.get_tpu_info()
        cap = int(getattr(info, "vmem_capacity_bytes", cap))
    except Exception:
        pass
    return int(min(48 << 20, (cap * 3) // 4))


def _fused_vmem_estimate(C, N, itemsize):
    # in + out double-buffered (4x native slab) + ~2x f32 temporaries + slack.
    return 4 * C * N * itemsize + 2 * C * N * 4 + (2 << 20)


def _phase_vmem_estimate(C, tn, itemsize):
    return 4 * C * tn * itemsize + 2 * C * tn * 4 + (2 << 20)


def _auto_tile_n(C, N, itemsize, budget):
    """Largest lane-dense tile (multiple of 128, or full N) fitting the budget."""
    per_lane = C * (4 * itemsize + 8)                  # in+out double-buffer + f32 temps
    avail = max(0, budget - (2 << 20))
    tn = (avail // per_lane) // 128 * 128
    cap = ((8 << 20) // max(1, C * itemsize)) // 128 * 128   # cap input tile ~8 MiB
    tn = min(tn, cap) if cap >= 128 else tn
    tn = int(max(128, tn))
    return N if tn >= N else tn


def _vmem_limit(est):
    return int(min(48 << 20, max(16 << 20, est + (4 << 20))))


# ---------------------------------------------------------------------------
# Wrapper.
# ---------------------------------------------------------------------------
def channel_attention(x, w1, w2, pool_mode="Avg|Max", *, donate_x=False,
                      vmem_budget_bytes=None, force_tile_n=None):
    """x: (B, C, H, W); w1: fc1 weight (C//ratio, C); w2: fc2 weight (C, C//ratio)."""
    assert ("Avg" in pool_mode) or ("Max" in pool_mode)
    B, C, H, W = x.shape
    N = H * W
    hidden = w1.shape[0]
    assert w1.shape == (hidden, C) and w2.shape == (C, hidden)

    xf = x.reshape(B, C, N)
    w1t = jnp.transpose(w1)                            # (C, hidden); tiny, done once by XLA
    itemsize = x.dtype.itemsize
    budget = int(vmem_budget_bytes) if vmem_budget_bytes is not None else _vmem_budget_bytes()
    alias = {0: 0} if donate_x else {}

    if force_tile_n is not None:                       # testing / manual override
        tn = int(force_tile_n)
        tn = N if tn >= N else max(128, (tn // 128) * 128)
        use_fused = (tn == N)
    else:
        use_fused = _fused_vmem_estimate(C, N, itemsize) <= budget
        tn = None if use_fused else _auto_tile_n(C, N, itemsize, budget)

    if use_fused:
        # ---- Single-pass: pool + MLP + sigmoid + apply, 1 read + 1 write of x. ----
        est = _fused_vmem_estimate(C, N, itemsize)
        out_flat = pl.pallas_call(
            functools.partial(_fused_kernel, n_total=N, pool_mode=pool_mode),
            out_shape=jax.ShapeDtypeStruct((B, C, N), x.dtype),
            grid_spec=pltpu.PrefetchScalarGridSpec(
                num_scalar_prefetch=0,
                grid=(B,),
                in_specs=[
                    pl.BlockSpec((1, C, N), lambda b: (b, 0, 0)),     # x slab
                    pl.BlockSpec((C, hidden), lambda b: (0, 0)),      # fc1.weight.T
                    pl.BlockSpec((C, hidden), lambda b: (0, 0)),      # fc2.weight
                ],
                out_specs=pl.BlockSpec((1, C, N), lambda b: (b, 0, 0)),
            ),
            compiler_params=pltpu.CompilerParams(
                dimension_semantics=("parallel",),
                vmem_limit_bytes=_vmem_limit(est)),
            input_output_aliases=alias,
            cost_estimate=pl.CostEstimate(
                flops=3 * B * C * N + 8 * B * C * hidden,
                transcendentals=B * C,
                bytes_accessed=2 * B * C * N * itemsize + 2 * C * hidden * 4),
        )(xf, w1t, w2)
        return out_flat.reshape(B, C, H, W)

    # ---- Phase-fused fallback: one launch, phase 0 pools, phase 1 applies. ----
    n_tiles = pl.cdiv(N, tn)
    est = _phase_vmem_estimate(C, tn, itemsize)
    out_flat = pl.pallas_call(
        functools.partial(_phase_kernel, n_total=N, tile_n=tn, pool_mode=pool_mode),
        out_shape=jax.ShapeDtypeStruct((B, C, N), x.dtype),
        grid_spec=pltpu.PrefetchScalarGridSpec(
            num_scalar_prefetch=0,
            grid=(B, 2, n_tiles),
            in_specs=[
                pl.BlockSpec((1, C, tn), lambda b, p, n: (b, 0, n)),   # x tile (both phases)
                pl.BlockSpec((C, hidden), lambda b, p, n: (0, 0)),     # fc1.weight.T
                pl.BlockSpec((C, hidden), lambda b, p, n: (0, 0)),     # fc2.weight
            ],
            # Phase 0 pins the output to block (b,0,0) (never written by the kernel,
            # so it is never flushed); phase 1 walks the tiles and writes them.
            out_specs=pl.BlockSpec((1, C, tn), lambda b, p, n: (b, 0, n * p)),
            scratch_shapes=[pltpu.VMEM((C, 1), jnp.float32),   # sum accumulator
                            pltpu.VMEM((C, 1), jnp.float32),   # max accumulator
                            pltpu.VMEM((C, 1), jnp.float32)],  # sigmoid gate
        ),
        compiler_params=pltpu.CompilerParams(
            dimension_semantics=("parallel", "arbitrary", "arbitrary"),
            vmem_limit_bytes=_vmem_limit(est)),
        input_output_aliases=alias,
        cost_estimate=pl.CostEstimate(
            flops=3 * B * C * N + 8 * B * C * hidden,
            transcendentals=B * C,
            bytes_accessed=3 * B * C * N * itemsize + 2 * C * hidden * 4),
    )(xf, w1t, w2)
    return out_flat.reshape(B, C, H, W)


# ---------------------------------------------------------------------------
# Pure-JAX reference mirroring the PyTorch forward.
# ---------------------------------------------------------------------------
def channel_attention_reference(x, w1, w2, pool_mode="Avg|Max"):
    def mlp(p):                                        # p: (B, C)
        h = jnp.maximum(p @ w1.T, 0.0)
        return h @ w2.T

    logits = None
    if "Avg" in pool_mode:
        logits = mlp(jnp.mean(x, axis=(2, 3)))
    if "Max" in pool_mode:
        m = mlp(jnp.max(x, axis=(2, 3)))
        logits = m if logits is None else logits + m
    scale = jax.nn.sigmoid(logits)
    return scale[:, :, None, None] * x


if __name__ == "__main__":
    key = jax.random.PRNGKey(0)
    kx, k1, k2, kx2 = jax.random.split(key, 4)

    # Module defaults: in_planes=32, ratio=16 -> hidden=2.
    B, C, H, W = 2, 32, 16, 16
    ratio = 16
    hidden = C // ratio

    x = jax.random.normal(kx, (B, C, H, W), dtype=jnp.float32)
    w1 = jax.random.normal(k1, (hidden, C), dtype=jnp.float32) * 0.2   # fc1.weight
    w2 = jax.random.normal(k2, (C, hidden), dtype=jnp.float32) * 0.2   # fc2.weight

    # 1) Fused single-pass path (slab fits VMEM), Avg|Max.
    out = jax.block_until_ready(channel_attention(x, w1, w2, pool_mode="Avg|Max"))
    ref = channel_attention_reference(x, w1, w2, pool_mode="Avg|Max")
    assert out.shape == (B, C, H, W)
    assert jnp.allclose(out, ref, atol=1e-5, rtol=1e-5), float(jnp.max(jnp.abs(out - ref)))

    # 2) Single-pool modes exercise the static pool_mode branches.
    for mode in ("Avg", "Max"):
        o = jax.block_until_ready(channel_attention(x, w1, w2, pool_mode=mode))
        r = channel_attention_reference(x, w1, w2, pool_mode=mode)
        assert jnp.allclose(o, r, atol=1e-5, rtol=1e-5), (mode, float(jnp.max(jnp.abs(o - r))))

    # 3) Phase-fused fallback path, N divisible by the tile (no masking anywhere).
    o = jax.block_until_ready(channel_attention(x, w1, w2, force_tile_n=128))
    assert jnp.allclose(o, ref, atol=1e-5, rtol=1e-5), float(jnp.max(jnp.abs(o - ref)))

    # 4) Phase-fused fallback with a ragged final tile (N = 400, tn = 128).
    x2 = jax.random.normal(kx2, (1, C, 20, 20), dtype=jnp.float32)
    o2 = jax.block_until_ready(channel_attention(x2, w1, w2, force_tile_n=128))
    r2 = channel_attention_reference(x2, w1, w2)
    assert jnp.allclose(o2, r2, atol=1e-5, rtol=1e-5), float(jnp.max(jnp.abs(o2 - r2)))

    print("KERNEL_OK")
</pallas_src>

<mosaic_0001>
module attributes {stable_mosaic.version = 11 : i64} {
  func.func @_fused_kernel(%arg0: i32, %arg1: memref<1x32x256xf32, #tpu.memory_space<vmem>>, %arg2: memref<32x2xf32, #tpu.memory_space<vmem>>, %arg3: memref<32x2xf32, #tpu.memory_space<vmem>>, %arg4: memref<1x32x256xf32, #tpu.memory_space<vmem>>) attributes {dimension_semantics = [#tpu.dimension_semantics<parallel>], iteration_bounds = array<i64: 2>, scalar_prefetch = 0 : i64, scratch_operands = 0 : i64, tpu.core_type = #tpu.core_type<tc>, window_params = [{transform_indices = @transform_0, window_bounds = array<i64: 1, 32, 256>}, {pipeline_mode = #tpu.pipeline_mode<synchronous>, transform_indices = @transform_1, window_bounds = array<i64: 32, 2>}, {pipeline_mode = #tpu.pipeline_mode<synchronous>, transform_indices = @transform_2, window_bounds = array<i64: 32, 2>}, {transform_indices = @transform_3, window_bounds = array<i64: 1, 32, 256>}]} {
    %c0 = arith.constant 0 : index
    %c0_0 = arith.constant 0 : index
    %c0_1 = arith.constant 0 : index
    %0 = vector.load %arg1[%c0, %c0_0, %c0_1] : memref<1x32x256xf32, #tpu.memory_space<vmem>>, vector<1x32x256xf32>
    %1 = vector.shape_cast %0 : vector<1x32x256xf32> to vector<32x256xf32>
    %cst = arith.constant dense<0.000000e+00> : vector<32xf32>
    %2 = vector.multi_reduction <add>, %1, %cst [1] : vector<32x256xf32> to vector<32xf32>
    %3 = vector.shape_cast %2 : vector<32xf32> to vector<32x1xf32>
    %cst_2 = arith.constant 3.906250e-03 : f32
    %4 = vector.broadcast %cst_2 : f32 to vector<32x1xf32>
    %5 = arith.mulf %3, %4 : vector<32x1xf32>
    %cst_3 = arith.constant dense<0xFF800000> : vector<32xf32>
    %6 = vector.multi_reduction <maximumf>, %1, %cst_3 [1] : vector<32x256xf32> to vector<32xf32>
    %7 = vector.shape_cast %6 : vector<32xf32> to vector<32x1xf32>
    %c0_4 = arith.constant 0 : index
    %c0_5 = arith.constant 0 : index
    %8 = vector.load %arg2[%c0_4, %c0_5] : memref<32x2xf32, #tpu.memory_space<vmem>>, vector<32x2xf32>
    %c0_6 = arith.constant 0 : index
    %c0_7 = arith.constant 0 : index
    %9 = vector.load %arg3[%c0_6, %c0_7] : memref<32x2xf32, #tpu.memory_space<vmem>>, vector<32x2xf32>
    %10 = vector.broadcast %5 : vector<32x1xf32> to vector<32x2xf32>
    %11 = arith.mulf %8, %10 : vector<32x2xf32>
    %cst_8 = arith.constant dense<0.000000e+00> : vector<2xf32>
    %12 = vector.multi_reduction <add>, %11, %cst_8 [0] : vector<32x2xf32> to vector<2xf32>
    %13 = vector.shape_cast %12 : vector<2xf32> to vector<1x2xf32>
    %cst_9 = arith.constant 0.000000e+00 : f32
    %14 = vector.broadcast %cst_9 : f32 to vector<1x2xf32>
    %15 = arith.maximumf %13, %14 : vector<1x2xf32>
    %16 = vector.broadcast %15 : vector<1x2xf32> to vector<32x2xf32>
    %17 = arith.mulf %9, %16 : vector<32x2xf32>
    %cst_10 = arith.constant dense<0.000000e+00> : vector<32xf32>
    %18 = vector.multi_reduction <add>, %17, %cst_10 [1] : vector<32x2xf32> to vector<32xf32>
    %19 = vector.shape_cast %18 : vector<32xf32> to vector<32x1xf32>
    %20 = vector.broadcast %7 : vector<32x1xf32> to vector<32x2xf32>
    %21 = arith.mulf %8, %20 : vector<32x2xf32>
    %cst_11 = arith.constant dense<0.000000e+00> : vector<2xf32>
    %22 = vector.multi_reduction <add>, %21, %cst_11 [0] : vector<32x2xf32> to vector<2xf32>
    %23 = vector.shape_cast %22 : vector<2xf32> to vector<1x2xf32>
    %cst_12 = arith.constant 0.000000e+00 : f32
    %24 = vector.broadcast %cst_12 : f32 to vector<1x2xf32>
    %25 = arith.maximumf %23, %24 : vector<1x2xf32>
    %26 = vector.broadcast %25 : vector<1x2xf32> to vector<32x2xf32>
    %27 = arith.mulf %9, %26 : vector<32x2xf32>
    %cst_13 = arith.constant dense<0.000000e+00> : vector<32xf32>
    %28 = vector.multi_reduction <add>, %27, %cst_13 [1] : vector<32x2xf32> to vector<32xf32>
    %29 = vector.shape_cast %28 : vector<32xf32> to vector<32x1xf32>
    %30 = arith.addf %19, %29 : vector<32x1xf32>
    %cst_14 = arith.constant 0.000000e+00 : f32
    %31 = vector.broadcast %cst_14 : f32 to vector<32x1xf32>
    %32 = arith.subf %31, %30 : vector<32x1xf32>
    %33 = math.exp %32 : vector<32x1xf32>
    %cst_15 = arith.constant 1.000000e+00 : f32
    %34 = vector.broadcast %cst_15 : f32 to vector<32x1xf32>
    %35 = arith.addf %34, %33 : vector<32x1xf32>
    %cst_16 = arith.constant 1.000000e+00 : f32
    %36 = vector.broadcast %cst_16 : f32 to vector<32x1xf32>
    %37 = arith.divf %36, %35 : vector<32x1xf32>
    %38 = vector.broadcast %37 : vector<32x1xf32> to vector<32x256xf32>
    %39 = arith.mulf %1, %38 : vector<32x256xf32>
    %c0_17 = arith.constant 0 : index
    %c0_18 = arith.constant 0 : index
    %c0_19 = arith.constant 0 : index
    %40 = vector.load %arg4[%c0_17, %c0_18, %c0_19] : memref<1x32x256xf32, #tpu.memory_space<vmem>>, vector<1x32x256xf32>
    %41 = vector.shape_cast %40 : vector<1x32x256xf32> to vector<32x256xf32>
    %42 = vector.shape_cast %39 : vector<32x256xf32> to vector<1x32x256xf32>
    tpu.vector_store %arg4[%c0_17, %c0_18, %c0_19], %42 {strides = array<i32>} : memref<1x32x256xf32, #tpu.memory_space<vmem>>, vector<1x32x256xf32>,
    return
  }
  func.func @transform_0(%arg0: i32) -> (i32, i32, i32) {
    %c0_i32 = arith.constant 0 : i32
    %c0_i32_0 = arith.constant 0 : i32
    %c0_i32_1 = arith.constant 0 : i32
    return %arg0, %c0_i32, %c0_i32_0 : i32, i32, i32
  }
  func.func @transform_1(%arg0: i32) -> (i32, i32) {
    %c0_i32 = arith.constant 0 : i32
    %c0_i32_0 = arith.constant 0 : i32
    %c0_i32_1 = arith.constant 0 : i32
    return %c0_i32, %c0_i32_0 : i32, i32
  }
  func.func @transform_2(%arg0: i32) -> (i32, i32) {
    %c0_i32 = arith.constant 0 : i32
    %c0_i32_0 = arith.constant 0 : i32
    %c0_i32_1 = arith.constant 0 : i32
    return %c0_i32, %c0_i32_0 : i32, i32
  }
  func.func @transform_3(%arg0: i32) -> (i32, i32, i32) {
    %c0_i32 = arith.constant 0 : i32
    %c0_i32_0 = arith.constant 0 : i32
    %c0_i32_1 = arith.constant 0 : i32
    return %arg0, %c0_i32, %c0_i32_0 : i32, i32, i32
  }
}

</mosaic_0001>

<llo_original>
// kernel: tpu_custom_call.1
$region0: #{tpu_custom_call.1}
  #allocation0 [shape = 'u32[]', space=smem, size = 0x4, offset = 0x4, fixed_abs, tag = 'smem constant byte address 0x4 - core index']
  #allocation1 [shape = 'u32[72,128]{1,0:T(1,128)}', space=vmem, size = 0x9000, scoped, tag = 'internal scratch']
  %s0 = inlined_call_operand.hbm [shape: f32[2,32,256], index: 0, kind: input, shape index: {}]
  %s1 = inlined_call_operand.vmem [shape: f32[32,2], index: 1, kind: input, shape index: {}]
  %s2 = inlined_call_operand.vmem [shape: f32[32,2], index: 2, kind: input, shape index: {}]
  %s3 = inlined_call_operand.hbm [shape: f32[2,32,256], index: 3, kind: output, shape index: {}]
  %s4 = sld [smem:[#allocation0]]
  $region49: #{tpu_custom_call.1} parent=0
    _
  %s6 = ssub.s32 1, %s4
  %s7 = scalar_select 0, %s6, %s4
  $region1: #{tpu_custom_call.1} parent=0
    #allocation2 [shape = 'u8[65536]{0}', space=vmem, size = 0x10000, scoped, tag = 'input window, operand 0']
    #allocation3 [shape = 's32[2]{0}', space=sflag, size = 0x8, scoped, tag = 'scoped memory for tpu_custom_call.1']
    #allocation4 [shape = 's32[2]{0}', space=sflag, size = 0x8, scoped, tag = 'scoped memory for tpu_custom_call.1']
    #allocation5 [shape = 'u8[65536]{0}', space=vmem, size = 0x10000, scoped, tag = 'output window, operand 0']
    %8 = vsyncpa [#allocation3], 0
    %s9 = scalar_lea.sflag [#allocation3], 1
    %10 = vsyncpa %s9, 0
    %11 = vsyncpa [#allocation4], 0
    %s12 = scalar_lea.sflag [#allocation4], 1
    %13 = vsyncpa %s12, 0
    loop: start=0, step=1, limit=4
    $region2: #{tpu_custom_call.1} parent=1 // loop_pre_header
      _
    $region3: #{tpu_custom_call.1} parent=1 // loop_header
      %s15 = sphi 0, %s19
      %p16 = scmp.ge.s32.totalorder %s15, 4
      %s25 = sphi 0, %s27
      %s28 = sphi 0, %s25
      %s29 = sphi 0, %s28
      %s45 = sphi 0, %s29
      %s49 = sphi 0, %s49
      %s51 = sphi 0, %s49
      %s52 = sphi 0, %s51
      %s66 = sphi 0, %s52
      %s70 = sphi 0, %s70
      %s72 = sphi 0, %s70
      %s73 = sphi 0, %s72
      %s87 = sphi 0, %s73
      %s93 = sphi 0, %s95
      %s96 = sphi 0, %s93
      %s97 = sphi 0, %s96
      %s113 = sphi 0, %s97
    $region4: #{tpu_custom_call.1} parent=1 // loop_header_branch
      %18 = sbr.rel (%p16) target = $region8
    $region5: #{tpu_custom_call.1} parent=1 // loop_body
      %s20 = ssub.s32 %s15, 1
      %s21 = ssub.s32 %s15, 2
      %s22 = sadd.s32 %s15, 1
      %s23 = ssub.s32 %s15, %s22
      %p24 = scmp.eq.s32.totalorder %s23, 0
      %s26 = sadd.s32 %s25, 1
      %s27 = scalar_select %p24, %s25, %s26
      %p30 = pneg %p24
      %p31 = scmp.eq.s32.totalorder %s15, 1
      %p32 = por %p30, %p31
      %p33 = scmp.ne.s32.totalorder %s25, %s28
      %p34 = scmp.eq.s32.totalorder %s15, 0
      %p35 = por %p33, %p34
      %p36 = scmp.ne.s32.totalorder %s25, %s28
      %p37 = scmp.eq.s32.totalorder %s20, 1
      %p38 = por %p36, %p37
      %p39 = scmp.ne.s32.totalorder %s28, %s29
      %p40 = scmp.eq.s32.totalorder %s20, 0
      %p41 = por %p39, %p40
      %p42 = scmp.ne.s32.totalorder %s28, %s29
      %p43 = scmp.eq.s32.totalorder %s21, 1
      %p44 = por %p42, %p43
      %p46 = scmp.ne.s32.totalorder %s29, %s45
      %p47 = scmp.eq.s32.totalorder %s21, 0
      %p48 = por %p46, %p47
      %s50 = sadd.s32 %s49, 1
      %p53 = scmp.eq.s32.totalorder %s15, 1
      %p54 = scmp.ne.s32.totalorder %s49, %s51
      %p55 = scmp.eq.s32.totalorder %s15, 0
      %p56 = por %p54, %p55
      %p57 = scmp.ne.s32.totalorder %s49, %s51
      %p58 = scmp.eq.s32.totalorder %s20, 1
      %p59 = por %p57, %p58
      %p60 = scmp.ne.s32.totalorder %s51, %s52
      %p61 = scmp.eq.s32.totalorder %s20, 0
      %p62 = por %p60, %p61
      %p63 = scmp.ne.s32.totalorder %s51, %s52
      %p64 = scmp.eq.s32.totalorder %s21, 1
      %p65 = por %p63, %p64
      %p67 = scmp.ne.s32.totalorder %s52, %s66
      %p68 = scmp.eq.s32.totalorder %s21, 0
      %p69 = por %p67, %p68
      %s71 = sadd.s32 %s70, 1
      %p74 = scmp.eq.s32.totalorder %s15, 1
      %p75 = scmp.ne.s32.totalorder %s70, %s72
      %p76 = scmp.eq.s32.totalorder %s15, 0
      %p77 = por %p75, %p76
      %p78 = scmp.ne.s32.totalorder %s70, %s72
      %p79 = scmp.eq.s32.totalorder %s20, 1
      %p80 = por %p78, %p79
      %p81 = scmp.ne.s32.totalorder %s72, %s73
      %p82 = scmp.eq.s32.totalorder %s20, 0
      %p83 = por %p81, %p82
      %p84 = scmp.ne.s32.totalorder %s72, %s73
      %p85 = scmp.eq.s32.totalorder %s21, 1
      %p86 = por %p84, %p85
      %p88 = scmp.ne.s32.totalorder %s73, %s87
      %p89 = scmp.eq.s32.totalorder %s21, 0
      %p90 = por %p88, %p89
      %s91 = ssub.s32 %s15, %s22
      %p92 = scmp.eq.s32.totalorder %s91, 0
      %s94 = sadd.s32 %s93, 1
      %s95 = scalar_select %p92, %s93, %s94
      %p98 = pneg %p92
      %p99 = scmp.eq.s32.totalorder %s15, 1
      %p100 = por %p98, %p99
      %p101 = scmp.ne.s32.totalorder %s93, %s96
      %p102 = scmp.eq.s32.totalorder %s15, 0
      %p103 = por %p101, %p102
      %p104 = scmp.ne.s32.totalorder %s93, %s96
      %p105 = scmp.eq.s32.totalorder %s20, 1
      %p106 = por %p104, %p105
      %p107 = scmp.ne.s32.totalorder %s96, %s97
      %p108 = scmp.eq.s32.totalorder %s20, 0
      %p109 = por %p107, %p108
      %p110 = scmp.ne.s32.totalorder %s96, %s97
      %p111 = scmp.eq.s32.totalorder %s21, 1
      %p112 = por %p110, %p111
      %p114 = scmp.ne.s32.totalorder %s97, %s113
      %p115 = scmp.eq.s32.totalorder %s21, 0
      %p116 = por %p114, %p115
      %p117 = scmp.le.s32.totalorder 1, %s15
      %p118 = scmp.lt.s32.totalorder %s15, 3
      %p119 = pnand %p117, %p118
      %p120 = pneg %p119
      // Predicated region
      $region9: #{tpu_custom_call.1} parent=5 // pred_check
        _
      $region10: #{tpu_custom_call.1} parent=5 // pred_check_branch
        %122 = sbr.rel (%p119) target = $region12
      $region11: #{tpu_custom_call.1} parent=5 // pred_region
        %s123 = ssub.s32 %s15, 1
        // Predicated region
        $region13: #{tpu_custom_call.1} parent=11 // pred_check
          %p124 = pneg %p62
        $region14: #{tpu_custom_call.1} parent=11 // pred_check_branch
          %126 = sbr.rel (%p124) target = $region16
        $region15: #{tpu_custom_call.1} parent=11 // pred_region
          _
        $region16: #{tpu_custom_call.1} parent=11 // pred_fallthru
          _
        // Predicated region
        $region17: #{tpu_custom_call.1} parent=11 // pred_check
          %p127 = pneg %p83
        $region18: #{tpu_custom_call.1} parent=11 // pred_check_branch
          %129 = sbr.rel (%p127) target = $region20
        $region19: #{tpu_custom_call.1} parent=11 // pred_region
          _
        $region20: #{tpu_custom_call.1} parent=11 // pred_fallthru
          _
      $region12: #{tpu_custom_call.1} parent=5 // pred_fallthru
        _
      %p130 = scmp.lt.s32.totalorder %s15, 2
      // Predicated region
      $region21: #{tpu_custom_call.1} parent=5 // pred_check
        %p131 = pneg %p130
      $region22: #{tpu_custom_call.1} parent=5 // pred_check_branch
        %133 = sbr.rel (%p131) target = $region24
      $region23: #{tpu_custom_call.1} parent=5 // pred_region
        // Predicated region
        $region25: #{tpu_custom_call.1} parent=23 // pred_check
          %p134 = pneg %p35
        $region26: #{tpu_custom_call.1} parent=23 // pred_check_branch
          %136 = sbr.rel (%p134) target = $region28
        $region27: #{tpu_custom_call.1} parent=23 // pred_region
          %s137 = sand.u32 %s25, 1
          %s138 = scalar_lea.sflag [#allocation3], %s137
          %s139 = sand.u32 %s25, 1
          %s140 = smul.addr %s139, 64
          %s141 = scalar_lea.vmem [#allocation2], %s140
          %143 = vsyncadd %s138, 0
          %s144 = smul.addr %s15, 8
          %s145 = smul.addr %s144, 8
          %s146 = scalar_lea.hbm %s0, %s145
          %s147 = sshll.u32 %s146, 4
          %s148 = int_to_ptr.hbm [resolvable:$true] %s147
          %s149 = sshll.u32 %s141, 4
          %s150 = int_to_ptr.vmem [resolvable:$true] %s149
          %155 = dma.hbm_to_vmem [thread:$0]  %s148, 1024, %s150, %s138, 256, 256, 16
        $region28: #{tpu_custom_call.1} parent=23 // pred_fallthru
          _
      $region24: #{tpu_custom_call.1} parent=5 // pred_fallthru
        _
      %p156 = scmp.le.s32.totalorder 1, %s15
      %p157 = scmp.lt.s32.totalorder %s15, 3
      %p158 = pnand %p156, %p157
      %p159 = pneg %p158
      // Predicated region
      $region29: #{tpu_custom_call.1} parent=5 // pred_check
        _
      $region30: #{tpu_custom_call.1} parent=5 // pred_check_branch
        %161 = sbr.rel (%p158) target = $region32
      $region31: #{tpu_custom_call.1} parent=5 // pred_region
        %s162 = ssub.s32 %s15, 1
        %s163 = sand.u32 %s28, 1
        %s164 = scalar_lea.sflag [#allocation3], %s163
        %s165 = sand.u32 %s28, 1
        %s166 = smul.addr %s165, 64
        %s167 = scalar_lea.vmem [#allocation2], %s166
        // Predicated region
        $region33: #{tpu_custom_call.1} parent=31 // pred_check
          %p168 = pneg %p41
        $region34: #{tpu_custom_call.1} parent=31 // pred_check_branch
          %170 = sbr.rel (%p168) target = $region36
        $region35: #{tpu_custom_call.1} parent=31 // pred_region
          %172 = dma.done %s164, 1024
        $region36: #{tpu_custom_call.1} parent=31 // pred_fallthru
          _
        %s173 = sand.u32 %s28, 1
        %s174 = scalar_lea.sflag [#allocation3], %s173
        %s175 = sand.u32 %s28, 1
        %s176 = smul.addr %s175, 64
        %s177 = scalar_lea.vmem [#allocation2], %s176
        %p178 = pneg %p41
        %p179 = pneg %p38
        %p180 = pneg %p62
        %p181 = pneg %p59
        %p182 = pneg %p83
        %p183 = pneg %p80
        %p184 = pneg %p109
        %p185 = pneg %p106
        %s186 = sand.u32 %s96, 1
        %s187 = scalar_lea.sflag [#allocation4], %s186
        %s188 = sand.u32 %s96, 1
        %s189 = smul.addr %s188, 64
        %s190 = scalar_lea.vmem [#allocation5], %s189
        %v191 = vld [vmem:[%s167] sm:$0xff]
        %v192 = vld [vmem:[%s167 + $0x8] sm:$0xff]
        %v193 = vld [vmem:[%s167 + $0x10] sm:$0xff]
        %v194 = vld [vmem:[%s167 + $0x18] sm:$0xff]
        %v195 = vld [vmem:[%s167 + $0x20] sm:$0xff]
        %v196 = vld [vmem:[%s167 + $0x28] sm:$0xff]
        %v197 = vld [vmem:[%s167 + $0x30] sm:$0xff]
        %v198 = vld [vmem:[%s167 + $0x38] sm:$0xff]
        %v199 = vadd.f32 %v191, %v192
        %200 = vadd.xlane.f32.xlu0 %v199
        %v201 = vpop.xlane.xlu0 %200
        %v202 = vadd.f32 %v193, %v194
        %203 = vadd.xlane.f32.xlu0 %v202
        %v204 = vpop.xlane.xlu0 %203
        %v205 = vadd.f32 %v195, %v196
        %206 = vadd.xlane.f32.xlu0 %v205
        %v207 = vpop.xlane.xlu0 %206
        %v208 = vadd.f32 %v197, %v198
        %209 = vadd.xlane.f32.xlu0 %v208
        %v210 = vpop.xlane.xlu0 %209
        %v211 = vmul.f32 %v201, 0.00390625
        %v212 = vmul.f32 %v204, 0.00390625
        %v213 = vmul.f32 %v207, 0.00390625
        %v214 = vmul.f32 %v210, 0.00390625
        %v215 = vmax.f32 %v191, %v192
        %216 = vmax.xlane.f32.xlu0 %v215
        %v217 = vpop.xlane.xlu0 %216
        %v218 = vmax.f32 %v193, %v194
        %219 = vmax.xlane.f32.xlu0 %v218
        %v220 = vpop.xlane.xlu0 %219
        %v221 = vmax.f32 %v195, %v196
        %222 = vmax.xlane.f32.xlu0 %v221
        %v223 = vpop.xlane.xlu0 %222
        %v224 = vmax.f32 %v197, %v198
        %225 = vmax.xlane.f32.xlu0 %v224
        %v226 = vpop.xlane.xlu0 %225
        %v227 = vld [vmem:[%s1] sm:$0xff]
        %v228 = vld [vmem:[%s1 + $0x8] sm:$0xff]
        %v229 = vld [vmem:[%s1 + $0x10] sm:$0xff]
        %v230 = vld [vmem:[%s1 + $0x18] sm:$0xff]
        %v231 = vld [vmem:[%s2] sm:$0xff]
        %v232 = vld [vmem:[%s2 + $0x8] sm:$0xff]
        %v233 = vld [vmem:[%s2 + $0x10] sm:$0xff]
        %v234 = vld [vmem:[%s2 + $0x18] sm:$0xff]
        %v235 = vmul.f32 %v227, %v211
        %v236 = vmul.f32 %v228, %v212
        %v237 = vmul.f32 %v229, %v213
        %v238 = vmul.f32 %v230, %v214
        %vm239 = vcmask 15360
        %v240 = vsel %vm239, %v235, 0.0
        %v241 = vsel %vm239, %v236, 0.0
        %v242 = vadd.f32 %v240, %v241
        %v243 = vsel %vm239, %v237, 0.0
        %v244 = vadd.f32 %v242, %v243
        %v245 = vsel %vm239, %v238, 0.0
        %v246 = vadd.f32 %v244, %v245
        %v247 = vrot.slane %v246, 4
        %v248 = vadd.f32 %v246, %v247
        %v249 = vrot.slane %v248, 2
        %v250 = vadd.f32 %v248, %v249
        %v251 = vrot.slane %v250, 1
        %v252 = vadd.f32 %v250, %v251
        %v253 = vmax.f32 %v252, 0.0
        %v254 = vmul.f32 %v231, %v253
        %v255 = vmul.f32 %v232, %v253
        %v256 = vmul.f32 %v233, %v253
        %v257 = vmul.f32 %v234, %v253
        %v258 = vsel %vm239, %v254, 0.0
        %259 = vadd.xlane.f32.xlu0 %v258
        %v260 = vpop.xlane.xlu0 %259
        %v261 = vsel %vm239, %v255, 0.0
        %262 = vadd.xlane.f32.xlu0 %v261
        %v263 = vpop.xlane.xlu0 %262
        %v264 = vsel %vm239, %v256, 0.0
        %265 = vadd.xlane.f32.xlu0 %v264
        %v266 = vpop.xlane.xlu0 %265
        %v267 = vsel %vm239, %v257, 0.0
        %268 = vadd.xlane.f32.xlu0 %v267
        %v269 = vpop.xlane.xlu0 %268
        %v270 = vmul.f32 %v227, %v217
        %v271 = vmul.f32 %v228, %v220
        %v272 = vmul.f32 %v229, %v223
        %v273 = vmul.f32 %v230, %v226
        %v274 = vsel %vm239, %v270, 0.0
        %v275 = vsel %vm239, %v271, 0.0
        %v276 = vadd.f32 %v274, %v275
        %v277 = vsel %vm239, %v272, 0.0
        %v278 = vadd.f32 %v276, %v277
        %v279 = vsel %vm239, %v273, 0.0
        %v280 = vadd.f32 %v278, %v279
        %v281 = vrot.slane %v280, 4
        %v282 = vadd.f32 %v280, %v281
        %v283 = vrot.slane %v282, 2
        %v284 = vadd.f32 %v282, %v283
        %v285 = vrot.slane %v284, 1
        %v286 = vadd.f32 %v284, %v285
        %v287 = vmax.f32 %v286, 0.0
        %v288 = vmul.f32 %v231, %v287
        %v289 = vmul.f32 %v232, %v287
        %v290 = vmul.f32 %v233, %v287
        %v291 = vmul.f32 %v234, %v287
        %v292 = vsel %vm239, %v288, 0.0
        %293 = vadd.xlane.f32.xlu0 %v292
        %v294 = vpop.xlane.xlu0 %293
        %v295 = vsel %vm239, %v289, 0.0
        %296 = vadd.xlane.f32.xlu0 %v295
        %v297 = vpop.xlane.xlu0 %296
        %v298 = vsel %vm239, %v290, 0.0
        %299 = vadd.xlane.f32.xlu0 %v298
        %v300 = vpop.xlane.xlu0 %299
        %v301 = vsel %vm239, %v291, 0.0
        %302 = vadd.xlane.f32.xlu0 %v301
        %v303 = vpop.xlane.xlu0 %302
        %v304 = vadd.f32 %v260, %v294
        %v305 = vadd.f32 %v263, %v297
        %v306 = vadd.f32 %v266, %v300
        %v307 = vadd.f32 %v269, %v303
        %v308 = vsub.f32 0.0, %v304
        %v309 = vsub.f32 0.0, %v305
        %v310 = vsub.f32 0.0, %v306
        %v311 = vsub.f32 0.0, %v307
        %v312 = vmul.f32 %v308, 1.442695
        %v313 = vpow.pop %v312
        %v314 = vmul.f32 %v309, 1.442695
        %v315 = vpow.pop %v314
        %v316 = vmul.f32 %v310, 1.442695
        %v317 = vpow.pop %v316
        %v318 = vmul.f32 %v311, 1.442695
        %v319 = vpow.pop %v318
        %v320 = vadd.f32 %v313, 1.0
        %v321 = vadd.f32 %v315, 1.0
        %v322 = vadd.f32 %v317, 1.0
        %v323 = vadd.f32 %v319, 1.0
        %v324 = vrcp.pop %v320
        %v325 = vmul.f32 %v320, %v324
        %v326 = vsub.f32 1.0, %v325
        %v327 = vmul.f32 %v324, %v326
        %v328 = vadd.f32 %v324, %v327
        %vm329 = vweird.f32 %v320
        %vm330 = vweird.f32 %v324
        %vm331 = vmor %vm329, %vm330
        %v332 = vsel %vm331, %v324, %v328
        %v333 = vand.u32 2147483647, %v320
        %vm334 = vcmp.eq.f32.partialorder %v333, 8.507059e+37
        %v335 = vand.u32 %v320, 2147483648
        %v336 = vor.u32 1.1754944e-38, %v335
        %v337 = vsel %vm334, %v336, %v332
        %v338 = vmul.f32 1.0, %v337
        %v339 = vrcp.pop %v321
        %v340 = vmul.f32 %v321, %v339
        %v341 = vsub.f32 1.0, %v340
        %v342 = vmul.f32 %v339, %v341
        %v343 = vadd.f32 %v339, %v342
        %vm344 = vweird.f32 %v321
        %vm345 = vweird.f32 %v339
        %vm346 = vmor %vm344, %vm345
        %v347 = vsel %vm346, %v339, %v343
        %v348 = vand.u32 2147483647, %v321
        %vm349 = vcmp.eq.f32.partialorder %v348, 8.507059e+37
        %v350 = vand.u32 %v321, 2147483648
        %v351 = vor.u32 1.1754944e-38, %v350
        %v352 = vsel %vm349, %v351, %v347
        %v353 = vmul.f32 1.0, %v352
        %v354 = vrcp.pop %v322
        %v355 = vmul.f32 %v322, %v354
        %v356 = vsub.f32 1.0, %v355
        %v357 = vmul.f32 %v354, %v356
        %v358 = vadd.f32 %v354, %v357
        %vm359 = vweird.f32 %v322
        %vm360 = vweird.f32 %v354
        %vm361 = vmor %vm359, %vm360
        %v362 = vsel %vm361, %v354, %v358
        %v363 = vand.u32 2147483647, %v322
        %vm364 = vcmp.eq.f32.partialorder %v363, 8.507059e+37
        %v365 = vand.u32 %v322, 2147483648
        %v366 = vor.u32 1.1754944e-38, %v365
        %v367 = vsel %vm364, %v366, %v362
        %v368 = vmul.f32 1.0, %v367
        %v369 = vrcp.pop %v323
        %v370 = vmul.f32 %v323, %v369
        %v371 = vsub.f32 1.0, %v370
        %v372 = vmul.f32 %v369, %v371
        %v373 = vadd.f32 %v369, %v372
        %vm374 = vweird.f32 %v323
        %vm375 = vweird.f32 %v369
        %vm376 = vmor %vm374, %vm375
        %v377 = vsel %vm376, %v369, %v373
        %v378 = vand.u32 2147483647, %v323
        %vm379 = vcmp.eq.f32.partialorder %v378, 8.507059e+37
        %v380 = vand.u32 %v323, 2147483648
        %v381 = vor.u32 1.1754944e-38, %v380
        %v382 = vsel %vm379, %v381, %v377
        %v383 = vmul.f32 1.0, %v382
        %v384 = vmul.f32 %v191, %v338
        %v385 = vmul.f32 %v192, %v338
        %v386 = vmul.f32 %v193, %v353
        %v387 = vmul.f32 %v194, %v353
        %v388 = vmul.f32 %v195, %v368
        %v389 = vmul.f32 %v196, %v368
        %v390 = vmul.f32 %v197, %v383
        %v391 = vmul.f32 %v198, %v383
        %392 = vst [vmem:[%s190] sm:$0xff] %v384
        %393 = vst [vmem:[%s190 + $0x8] sm:$0xff] %v385
        %394 = vst [vmem:[%s190 + $0x10] sm:$0xff] %v386
        %395 = vst [vmem:[%s190 + $0x18] sm:$0xff] %v387
        %396 = vst [vmem:[%s190 + $0x20] sm:$0xff] %v388
        %397 = vst [vmem:[%s190 + $0x28] sm:$0xff] %v389
        %398 = vst [vmem:[%s190 + $0x30] sm:$0xff] %v390
        %399 = vst [vmem:[%s190 + $0x38] sm:$0xff] %v391
        %s400 = sand.u32 %s96, 1
        %s401 = scalar_lea.sflag [#allocation4], %s400
        %s402 = sand.u32 %s96, 1
        %s403 = smul.addr %s402, 64
        %s404 = scalar_lea.vmem [#allocation5], %s403
        // Predicated region
        $region37: #{tpu_custom_call.1} parent=31 // pred_check
          %p405 = pneg %p106
        $region38: #{tpu_custom_call.1} parent=31 // pred_check_branch
          %407 = sbr.rel (%p405) target = $region40
        $region39: #{tpu_custom_call.1} parent=31 // pred_region
          %409 = vsyncadd %s401, 0
          %s410 = smul.addr %s20, 8
          %s411 = smul.addr %s410, 8
          %s412 = scalar_lea.hbm %s3, %s411
          %s413 = sshll.u32 %s404, 4
          %s414 = int_to_ptr.vmem [resolvable:$true] %s413
          %s415 = sshll.u32 %s412, 4
          %s416 = int_to_ptr.hbm [resolvable:$true] %s415
          %421 = dma.vmem_to_hbm [thread:$0]  %s414, 1024, %s416, %s401, 256, 256, 16
        $region40: #{tpu_custom_call.1} parent=31 // pred_fallthru
          _
      $region32: #{tpu_custom_call.1} parent=5 // pred_fallthru
        _
      %p422 = scmp.le.s32.totalorder 2, %s15
      // Predicated region
      $region41: #{tpu_custom_call.1} parent=5 // pred_check
        %p423 = pneg %p422
      $region42: #{tpu_custom_call.1} parent=5 // pred_check_branch
        %425 = sbr.rel (%p423) target = $region44
      $region43: #{tpu_custom_call.1} parent=5 // pred_region
        %s426 = ssub.s32 %s15, 2
        // Predicated region
        $region45: #{tpu_custom_call.1} parent=43 // pred_check
          %p427 = pneg %p112
        $region46: #{tpu_custom_call.1} parent=43 // pred_check_branch
          %429 = sbr.rel (%p427) target = $region48
        $region47: #{tpu_custom_call.1} parent=43 // pred_region
          %s430 = sand.u32 %s97, 1
          %s431 = scalar_lea.sflag [#allocation4], %s430
          %s432 = sand.u32 %s97, 1
          %s433 = smul.addr %s432, 64
          %s434 = scalar_lea.vmem [#allocation5], %s433
          %436 = dma.done %s431, 1024
        $region48: #{tpu_custom_call.1} parent=43 // pred_fallthru
          _
      $region44: #{tpu_custom_call.1} parent=5 // pred_fallthru
        _
    $region6: #{tpu_custom_call.1} parent=1 // loop_footer
      %s19 = sadd.s32 1, %s15
    $region7: #{tpu_custom_call.1} parent=1 // loop_footer_branch
      %14 = sbr.rel target = $region3
    $region8: #{tpu_custom_call.1} parent=1 // loop_exit
      _
    %437 = vsyncpa [#allocation3], 1
    %s438 = scalar_lea.sflag [#allocation3], 1
    %439 = vsyncpa %s438, 1
    %440 = vsyncpa [#allocation4], 1
    %s441 = scalar_lea.sflag [#allocation4], 1
    %442 = vsyncpa %s441, 1

</llo_original>
